<compile_context>
chip_gen: v7x
topology: tpu7x:2x2x1
jax: 0.10.0
libtpu: 0.0.40
codegen_flags: <defaults>
</compile_context>

<pallas_src>
import math
import jax
import jax.numpy as jnp
from jax.experimental import pallas as pl
from jax.experimental.pallas import tpu as pltpu

N_TRACK = 10
N_WAYPOINTS = 3
IN_DIM = N_TRACK * 2 * 2          # 40
HALF_IN = N_TRACK * 2             # 20 (flattened features from one side)
HIDDEN = 128
OUT_DIM = N_WAYPOINTS * 2         # 6
MAX_B_TILE = 1024                 # rows per grid step (multiple of 8)


def mlp_planner_kernel(left_ref, right_ref,
                       w1l_ref, w1r_ref, b1_ref,
                       w2_ref, b2_ref, w3_ref, b3_ref,
                       out_ref):
    # Layer 1: torch's cat([left, right], -1).view(B, 40) @ W1 is realized as two
    # partial matmuls against row-permuted halves of W1, so the concatenated
    # feature tensor is never materialized in HBM.
    h = (jnp.dot(left_ref[...], w1l_ref[...], preferred_element_type=jnp.float32)
         + jnp.dot(right_ref[...], w1r_ref[...], preferred_element_type=jnp.float32)
         + b1_ref[...])
    h = jnp.maximum(h, 0.0)                                           # (bt, 128)
    h = jnp.dot(h, w2_ref[...], preferred_element_type=jnp.float32) + b2_ref[...]
    h = jnp.maximum(h, 0.0)                                           # (bt, 128)
    out_ref[...] = (jnp.dot(h, w3_ref[...], preferred_element_type=jnp.float32)
                    + b3_ref[...])                                    # (bt, 6)


def _round_up(x, m):
    return ((x + m - 1) // m) * m


def init_params(key):
    """Xavier-uniform weights (stored pre-transposed as (in, out)), zero biases."""
    k1, k2, k3 = jax.random.split(key, 3)

    def xavier(k, fan_in, fan_out):
        bound = math.sqrt(6.0 / (fan_in + fan_out))
        return jax.random.uniform(k, (fan_in, fan_out), jnp.float32,
                                  minval=-bound, maxval=bound)

    return dict(
        w1=xavier(k1, IN_DIM, HIDDEN), b1=jnp.zeros((1, HIDDEN), jnp.float32),
        w2=xavier(k2, HIDDEN, HIDDEN), b2=jnp.zeros((1, HIDDEN), jnp.float32),
        w3=xavier(k3, HIDDEN, OUT_DIM), b3=jnp.zeros((1, OUT_DIM), jnp.float32),
    )


def prepare_params(params):
    """Split W1 (40,128) into left/right row-permuted halves consumed by the kernel.

    torch feature order after cat(dim=-1).view(B,40) is, per track point t:
      [4t+0]=left[t,0], [4t+1]=left[t,1], [4t+2]=right[t,0], [4t+3]=right[t,1]
    The kernel consumes left.reshape(B,20) / right.reshape(B,20), whose feature 2t+c
    maps to original rows 4t+c (left) and 4t+2+c (right) of W1.
    """
    idx = jnp.arange(N_TRACK)[:, None] * 4 + jnp.arange(2)[None, :]
    idx_left = idx.reshape(-1)
    idx_right = (idx + 2).reshape(-1)
    p = dict(params)
    p["w1l"] = params["w1"][idx_left]      # (20, 128)
    p["w1r"] = params["w1"][idx_right]     # (20, 128)
    return p


def mlp_planner_forward(track_left, track_right, params):
    B = track_left.shape[0]

    # Contiguous reshapes are free (no data movement); the concat is fused in-kernel.
    left = track_left.reshape(B, HALF_IN).astype(jnp.float32)         # (B, 20)
    right = track_right.reshape(B, HALF_IN).astype(jnp.float32)       # (B, 20)

    # Batch tiling: multiple of 8 sublanes, capped at MAX_B_TILE rows per step.
    b_tile = min(MAX_B_TILE, _round_up(max(B, 1), 8))
    grid = (pl.cdiv(B, b_tile),)

    weights = [params["w1l"], params["w1r"], params["b1"],
               params["w2"], params["b2"], params["w3"], params["b3"]]

    def invariant(shape):
        # Grid-invariant block -> Pallas DMAs it once and keeps it resident.
        return pl.BlockSpec(shape, lambda i, _nd=len(shape): (0,) * _nd)

    in_specs = ([pl.BlockSpec((b_tile, HALF_IN), lambda i: (i, 0)),
                 pl.BlockSpec((b_tile, HALF_IN), lambda i: (i, 0))]
                + [invariant(w.shape) for w in weights])

    out = pl.pallas_call(
        mlp_planner_kernel,
        grid=grid,
        in_specs=in_specs,
        out_specs=pl.BlockSpec((b_tile, OUT_DIM), lambda i: (i, 0)),
        out_shape=jax.ShapeDtypeStruct((B, OUT_DIM), jnp.float32),
        compiler_params=pltpu.CompilerParams(
            dimension_semantics=("parallel",),
            vmem_limit_bytes=32 << 20),
    )(left, right, *weights)

    return out.reshape(B, N_WAYPOINTS, 2)


if __name__ == "__main__":
    key = jax.random.PRNGKey(0)
    kp, k1, k2 = jax.random.split(key, 3)
    params = prepare_params(init_params(kp))

    B = 2
    track_left = jax.random.normal(k1, (B, N_TRACK, 2), dtype=jnp.float32)
    track_right = jax.random.normal(k2, (B, N_TRACK, 2), dtype=jnp.float32)

    waypoints = mlp_planner_forward(track_left, track_right, params)
    jax.block_until_ready(waypoints)

    # Pure-JAX reference (uses the original, un-permuted W1 and the torch concat
    # order), validating both the MLP math and the in-kernel concat fusion.
    x_ref = jnp.concatenate([track_left, track_right], axis=-1).reshape(B, IN_DIM)
    h = jnp.maximum(x_ref @ params["w1"] + params["b1"], 0.0)
    h = jnp.maximum(h @ params["w2"] + params["b2"], 0.0)
    ref = (h @ params["w3"] + params["b3"]).reshape(B, N_WAYPOINTS, 2)

    assert waypoints.shape == (B, N_WAYPOINTS, 2)
    assert bool(jnp.all(jnp.isfinite(waypoints)))
    assert bool(jnp.allclose(waypoints, ref, atol=1e-5, rtol=1e-5))
    print("KERNEL_OK")
</pallas_src>

<mosaic_0001>
module attributes {stable_mosaic.version = 11 : i64} {
  func.func @mlp_planner_kernel(%arg0: i32, %arg1: memref<8x20xf32, #tpu.memory_space<vmem>>, %arg2: memref<8x20xf32, #tpu.memory_space<vmem>>, %arg3: memref<20x128xf32, #tpu.memory_space<vmem>>, %arg4: memref<20x128xf32, #tpu.memory_space<vmem>>, %arg5: memref<1x128xf32, #tpu.memory_space<vmem>>, %arg6: memref<128x128xf32, #tpu.memory_space<vmem>>, %arg7: memref<1x128xf32, #tpu.memory_space<vmem>>, %arg8: memref<128x6xf32, #tpu.memory_space<vmem>>, %arg9: memref<1x6xf32, #tpu.memory_space<vmem>>, %arg10: memref<8x6xf32, #tpu.memory_space<vmem>>) attributes {dimension_semantics = [#tpu.dimension_semantics<parallel>], iteration_bounds = array<i64: 1>, scalar_prefetch = 0 : i64, scratch_operands = 0 : i64, tpu.core_type = #tpu.core_type<tc>, window_params = [{transform_indices = @transform_0, window_bounds = array<i64: 8, 20>}, {transform_indices = @transform_1, window_bounds = array<i64: 8, 20>}, {pipeline_mode = #tpu.pipeline_mode<synchronous>, transform_indices = @transform_2, window_bounds = array<i64: 20, 128>}, {pipeline_mode = #tpu.pipeline_mode<synchronous>, transform_indices = @transform_3, window_bounds = array<i64: 20, 128>}, {pipeline_mode = #tpu.pipeline_mode<synchronous>, transform_indices = @transform_4, window_bounds = array<i64: 1, 128>}, {pipeline_mode = #tpu.pipeline_mode<synchronous>, transform_indices = @transform_5, window_bounds = array<i64: 128, 128>}, {pipeline_mode = #tpu.pipeline_mode<synchronous>, transform_indices = @transform_6, window_bounds = array<i64: 1, 128>}, {pipeline_mode = #tpu.pipeline_mode<synchronous>, transform_indices = @transform_7, window_bounds = array<i64: 128, 6>}, {pipeline_mode = #tpu.pipeline_mode<synchronous>, transform_indices = @transform_8, window_bounds = array<i64: 1, 6>}, {transform_indices = @transform_9, window_bounds = array<i64: 8, 6>}]} {
    %c0 = arith.constant 0 : index
    %c0_0 = arith.constant 0 : index
    %0 = vector.load %arg1[%c0, %c0_0] : memref<8x20xf32, #tpu.memory_space<vmem>>, vector<8x20xf32>
    %c0_1 = arith.constant 0 : index
    %c0_2 = arith.constant 0 : index
    %1 = vector.load %arg3[%c0_1, %c0_2] : memref<20x128xf32, #tpu.memory_space<vmem>>, vector<20x128xf32>
    %cst = arith.constant dense<0.000000e+00> : vector<8x128xf32>
    %2 = tpu.matmul %0, %1, %cst {dimension_numbers = #tpu.dot_dimension_numbers<[1], [0], [0], [1], [0, 0, 1, 1], [], []>} : vector<8x20xf32>, vector<20x128xf32>, vector<8x128xf32> -> vector<8x128xf32>
    %c0_3 = arith.constant 0 : index
    %c0_4 = arith.constant 0 : index
    %3 = vector.load %arg2[%c0_3, %c0_4] : memref<8x20xf32, #tpu.memory_space<vmem>>, vector<8x20xf32>
    %c0_5 = arith.constant 0 : index
    %c0_6 = arith.constant 0 : index
    %4 = vector.load %arg4[%c0_5, %c0_6] : memref<20x128xf32, #tpu.memory_space<vmem>>, vector<20x128xf32>
    %cst_7 = arith.constant dense<0.000000e+00> : vector<8x128xf32>
    %5 = tpu.matmul %3, %4, %cst_7 {dimension_numbers = #tpu.dot_dimension_numbers<[1], [0], [0], [1], [0, 0, 1, 1], [], []>} : vector<8x20xf32>, vector<20x128xf32>, vector<8x128xf32> -> vector<8x128xf32>
    %6 = arith.addf %2, %5 : vector<8x128xf32>
    %c0_8 = arith.constant 0 : index
    %c0_9 = arith.constant 0 : index
    %7 = vector.load %arg5[%c0_8, %c0_9] : memref<1x128xf32, #tpu.memory_space<vmem>>, vector<1x128xf32>
    %8 = vector.broadcast %7 : vector<1x128xf32> to vector<8x128xf32>
    %9 = arith.addf %6, %8 : vector<8x128xf32>
    %cst_10 = arith.constant 0.000000e+00 : f32
    %10 = vector.broadcast %cst_10 : f32 to vector<8x128xf32>
    %11 = arith.maximumf %9, %10 : vector<8x128xf32>
    %c0_11 = arith.constant 0 : index
    %c0_12 = arith.constant 0 : index
    %12 = vector.load %arg6[%c0_11, %c0_12] : memref<128x128xf32, #tpu.memory_space<vmem>>, vector<128x128xf32>
    %cst_13 = arith.constant dense<0.000000e+00> : vector<8x128xf32>
    %13 = tpu.matmul %11, %12, %cst_13 {dimension_numbers = #tpu.dot_dimension_numbers<[1], [0], [0], [1], [0, 0, 1, 1], [], []>} : vector<8x128xf32>, vector<128x128xf32>, vector<8x128xf32> -> vector<8x128xf32>
    %c0_14 = arith.constant 0 : index
    %c0_15 = arith.constant 0 : index
    %14 = vector.load %arg7[%c0_14, %c0_15] : memref<1x128xf32, #tpu.memory_space<vmem>>, vector<1x128xf32>
    %15 = vector.broadcast %14 : vector<1x128xf32> to vector<8x128xf32>
    %16 = arith.addf %13, %15 : vector<8x128xf32>
    %cst_16 = arith.constant 0.000000e+00 : f32
    %17 = vector.broadcast %cst_16 : f32 to vector<8x128xf32>
    %18 = arith.maximumf %16, %17 : vector<8x128xf32>
    %c0_17 = arith.constant 0 : index
    %c0_18 = arith.constant 0 : index
    %19 = vector.load %arg8[%c0_17, %c0_18] : memref<128x6xf32, #tpu.memory_space<vmem>>, vector<128x6xf32>
    %cst_19 = arith.constant dense<0.000000e+00> : vector<8x6xf32>
    %20 = tpu.matmul %18, %19, %cst_19 {dimension_numbers = #tpu.dot_dimension_numbers<[1], [0], [0], [1], [0, 0, 1, 1], [], []>} : vector<8x128xf32>, vector<128x6xf32>, vector<8x6xf32> -> vector<8x6xf32>
    %c0_20 = arith.constant 0 : index
    %c0_21 = arith.constant 0 : index
    %21 = vector.load %arg9[%c0_20, %c0_21] : memref<1x6xf32, #tpu.memory_space<vmem>>, vector<1x6xf32>
    %22 = vector.broadcast %21 : vector<1x6xf32> to vector<8x6xf32>
    %23 = arith.addf %20, %22 : vector<8x6xf32>
    %c0_22 = arith.constant 0 : index
    %c0_23 = arith.constant 0 : index
    %24 = vector.load %arg10[%c0_22, %c0_23] : memref<8x6xf32, #tpu.memory_space<vmem>>, vector<8x6xf32>
    tpu.vector_store %arg10[%c0_22, %c0_23], %23 {strides = array<i32>} : memref<8x6xf32, #tpu.memory_space<vmem>>, vector<8x6xf32>,
    return
  }
  func.func @transform_0(%arg0: i32) -> (i32, i32) {
    %c0_i32 = arith.constant 0 : i32
    %c0_i32_0 = arith.constant 0 : i32
    return %arg0, %c0_i32 : i32, i32
  }
  func.func @transform_1(%arg0: i32) -> (i32, i32) {
    %c0_i32 = arith.constant 0 : i32
    %c0_i32_0 = arith.constant 0 : i32
    return %arg0, %c0_i32 : i32, i32
  }
  func.func @transform_2(%arg0: i32) -> (i32, i32) {
    %c0_i32 = arith.constant 0 : i32
    %c0_i32_0 = arith.constant 0 : i32
    %c0_i32_1 = arith.constant 0 : i32
    return %c0_i32, %c0_i32_0 : i32, i32
  }
  func.func @transform_3(%arg0: i32) -> (i32, i32) {
    %c0_i32 = arith.constant 0 : i32
    %c0_i32_0 = arith.constant 0 : i32
    %c0_i32_1 = arith.constant 0 : i32
    return %c0_i32, %c0_i32_0 : i32, i32
  }
  func.func @transform_4(%arg0: i32) -> (i32, i32) {
    %c0_i32 = arith.constant 0 : i32
    %c0_i32_0 = arith.constant 0 : i32
    %c0_i32_1 = arith.constant 0 : i32
    return %c0_i32, %c0_i32_0 : i32, i32
  }
  func.func @transform_5(%arg0: i32) -> (i32, i32) {
    %c0_i32 = arith.constant 0 : i32
    %c0_i32_0 = arith.constant 0 : i32
    %c0_i32_1 = arith.constant 0 : i32
    return %c0_i32, %c0_i32_0 : i32, i32
  }
  func.func @transform_6(%arg0: i32) -> (i32, i32) {
    %c0_i32 = arith.constant 0 : i32
    %c0_i32_0 = arith.constant 0 : i32
    %c0_i32_1 = arith.constant 0 : i32
    return %c0_i32, %c0_i32_0 : i32, i32
  }
  func.func @transform_7(%arg0: i32) -> (i32, i32) {
    %c0_i32 = arith.constant 0 : i32
    %c0_i32_0 = arith.constant 0 : i32
    %c0_i32_1 = arith.constant 0 : i32
    return %c0_i32, %c0_i32_0 : i32, i32
  }
  func.func @transform_8(%arg0: i32) -> (i32, i32) {
    %c0_i32 = arith.constant 0 : i32
    %c0_i32_0 = arith.constant 0 : i32
    %c0_i32_1 = arith.constant 0 : i32
    return %c0_i32, %c0_i32_0 : i32, i32
  }
  func.func @transform_9(%arg0: i32) -> (i32, i32) {
    %c0_i32 = arith.constant 0 : i32
    %c0_i32_0 = arith.constant 0 : i32
    return %arg0, %c0_i32 : i32, i32
  }
}

</mosaic_0001>

<llo_original>
// kernel: tpu_custom_call.1
$region0: #{tpu_custom_call.1}
  #allocation0 [shape = 'u32[]', space=smem, size = 0x4, offset = 0x4, fixed_abs, tag = 'smem constant byte address 0x4 - core index']
  #allocation1 [shape = 'u32[144,128]{1,0:T(1,128)}', space=vmem, size = 0x12000, scoped, tag = 'internal scratch']
  %s0 = inlined_call_operand.vmem [shape: f32[2,20], index: 0, kind: input, shape index: {}]
  %s1 = inlined_call_operand.hbm [shape: f32[2,20], index: 1, kind: input, shape index: {}]
  %s2 = inlined_call_operand.vmem [shape: f32[20,128], index: 2, kind: input, shape index: {}]
  %s3 = inlined_call_operand.hbm [shape: f32[20,128], index: 3, kind: input, shape index: {}]
  %s4 = inlined_call_operand.hbm [shape: f32[1,128], index: 4, kind: input, shape index: {}]
  %s5 = inlined_call_operand.vmem [shape: f32[128,128], index: 5, kind: input, shape index: {}]
  %s6 = inlined_call_operand.hbm [shape: f32[1,128], index: 6, kind: input, shape index: {}]
  %s7 = inlined_call_operand.vmem [shape: f32[128,6], index: 7, kind: input, shape index: {}]
  %s8 = inlined_call_operand.vmem [shape: f32[1,6], index: 8, kind: input, shape index: {}]
  %s9 = inlined_call_operand.hbm [shape: f32[2,6], index: 9, kind: output, shape index: {}]
  %s10 = sld [smem:[#allocation0]]
  $region62: #{tpu_custom_call.1} parent=0
    _
  %s12 = ssub.s32 1, %s10
  %s13 = scalar_select 0, %s12, %s10
  $region1: #{tpu_custom_call.1} parent=0
    #allocation2 [shape = 'u8[4096]{0}', space=vmem, size = 0x1000, scoped, tag = 'input window, operand 1, single buffered']
    #allocation3 [shape = 's32[1]{0}', space=sflag, size = 0x4, scoped, tag = 'scoped memory for tpu_custom_call.1']
    #allocation4 [shape = 's32[1]{0}', space=sflag, size = 0x4, scoped, tag = 'scoped memory for tpu_custom_call.1']
    #allocation5 [shape = 'u8[12288]{0}', space=vmem, size = 0x3000, scoped, tag = 'input window, operand 3, single buffered']
    #allocation6 [shape = 's32[1]{0}', space=sflag, size = 0x4, scoped, tag = 'scoped memory for tpu_custom_call.1']
    #allocation7 [shape = 'u8[512]{0}', space=vmem, size = 0x400, scoped, tag = 'input window, operand 4, single buffered']
    #allocation8 [shape = 'u8[512]{0}', space=vmem, size = 0x400, scoped, tag = 'input window, operand 6, single buffered']
    #allocation9 [shape = 's32[1]{0}', space=sflag, size = 0x4, scoped, tag = 'scoped memory for tpu_custom_call.1']
    #allocation10 [shape = 'u8[4096]{0}', space=vmem, size = 0x1000, scoped, tag = 'output window, operand 0, single buffered']
    %14 = vsyncpa [#allocation3], 0
    %15 = vsyncpa [#allocation6], 0
    %16 = vsyncpa [#allocation9], 0
    %17 = vsyncpa [#allocation4], 0
    // Predicated region
    $region2: #{tpu_custom_call.1} parent=1 // pred_check
      _
    $region3: #{tpu_custom_call.1} parent=1 // pred_check_branch
      %19 = sbr.rel (0) target = $region5
    $region4: #{tpu_custom_call.1} parent=1 // pred_region
      _
    $region5: #{tpu_custom_call.1} parent=1 // pred_fallthru
      _
    // Predicated region
    $region6: #{tpu_custom_call.1} parent=1 // pred_check
      _
    $region7: #{tpu_custom_call.1} parent=1 // pred_check_branch
      %21 = sbr.rel (0) target = $region9
    $region8: #{tpu_custom_call.1} parent=1 // pred_region
      %s23 = ssub.s32 128, 32
      %24 = vsyncadd [#allocation3], %s23
      %s25 = sshll.u32 [#allocation2], 4
      %s26 = int_to_ptr.vmem [resolvable:$true] %s25
      %31 = dma.hbm_to_vmem [thread:$0]  %s1, 32, %s26, [#allocation3], 32, 32, 2
    $region9: #{tpu_custom_call.1} parent=1 // pred_fallthru
      _
    // Predicated region
    $region10: #{tpu_custom_call.1} parent=1 // pred_check
      _
    $region11: #{tpu_custom_call.1} parent=1 // pred_check_branch
      %33 = sbr.rel (0) target = $region13
    $region12: #{tpu_custom_call.1} parent=1 // pred_region
      _
    $region13: #{tpu_custom_call.1} parent=1 // pred_fallthru
      _
    // Predicated region
    $region14: #{tpu_custom_call.1} parent=1 // pred_check
      _
    $region15: #{tpu_custom_call.1} parent=1 // pred_check_branch
      %35 = sbr.rel (0) target = $region17
    $region16: #{tpu_custom_call.1} parent=1 // pred_region
      %s37 = ssub.s32 384, 384
      %38 = vsyncadd [#allocation6], %s37
      %s39 = sshll.u32 [#allocation5], 4
      %s40 = int_to_ptr.vmem [resolvable:$true] %s39
      %45 = dma.hbm_to_vmem [thread:$0]  %s3, 384, %s40, [#allocation6], 128, 128, 8
    $region17: #{tpu_custom_call.1} parent=1 // pred_fallthru
      _
    // Predicated region
    $region18: #{tpu_custom_call.1} parent=1 // pred_check
      _
    $region19: #{tpu_custom_call.1} parent=1 // pred_check_branch
      %47 = sbr.rel (0) target = $region21
    $region20: #{tpu_custom_call.1} parent=1 // pred_region
      %s49 = ssub.s32 16, 16
      %50 = vsyncadd [#allocation6], %s49
      %s52 = sshll.u32 [#allocation7], 4
      %s53 = int_to_ptr.vmem [resolvable:$true] %s52
      %55 = dma.hbm_to_vmem [thread:$0]  %s4, 16, %s53, [#allocation6]
    $region21: #{tpu_custom_call.1} parent=1 // pred_fallthru
      _
    // Predicated region
    $region22: #{tpu_custom_call.1} parent=1 // pred_check
      _
    $region23: #{tpu_custom_call.1} parent=1 // pred_check_branch
      %57 = sbr.rel (0) target = $region25
    $region24: #{tpu_custom_call.1} parent=1 // pred_region
      _
    $region25: #{tpu_custom_call.1} parent=1 // pred_fallthru
      _
    // Predicated region
    $region26: #{tpu_custom_call.1} parent=1 // pred_check
      _
    $region27: #{tpu_custom_call.1} parent=1 // pred_check_branch
      %59 = sbr.rel (0) target = $region29
    $region28: #{tpu_custom_call.1} parent=1 // pred_region
      %s61 = ssub.s32 16, 16
      %62 = vsyncadd [#allocation9], %s61
      %s64 = sshll.u32 [#allocation8], 4
      %s65 = int_to_ptr.vmem [resolvable:$true] %s64
      %67 = dma.hbm_to_vmem [thread:$0]  %s6, 16, %s65, [#allocation9]
    $region29: #{tpu_custom_call.1} parent=1 // pred_fallthru
      _
    // Predicated region
    $region30: #{tpu_custom_call.1} parent=1 // pred_check
      _
    $region31: #{tpu_custom_call.1} parent=1 // pred_check_branch
      %69 = sbr.rel (0) target = $region33
    $region32: #{tpu_custom_call.1} parent=1 // pred_region
      _
    $region33: #{tpu_custom_call.1} parent=1 // pred_fallthru
      _
    // Predicated region
    $region34: #{tpu_custom_call.1} parent=1 // pred_check
      _
    $region35: #{tpu_custom_call.1} parent=1 // pred_check_branch
      %71 = sbr.rel (0) target = $region37
    $region36: #{tpu_custom_call.1} parent=1 // pred_region
      _
    $region37: #{tpu_custom_call.1} parent=1 // pred_fallthru
      _
    // Predicated region
    $region38: #{tpu_custom_call.1} parent=1 // pred_check
      _
    $region39: #{tpu_custom_call.1} parent=1 // pred_check_branch
      %73 = sbr.rel (0) target = $region41
    $region40: #{tpu_custom_call.1} parent=1 // pred_region
      %74 = dma.done [#allocation3], 128
    $region41: #{tpu_custom_call.1} parent=1 // pred_fallthru
      _
    // Predicated region
    $region42: #{tpu_custom_call.1} parent=1 // pred_check
      _
    $region43: #{tpu_custom_call.1} parent=1 // pred_check_branch
      %76 = sbr.rel (0) target = $region45
    $region44: #{tpu_custom_call.1} parent=1 // pred_region
      %77 = dma.done [#allocation6], 384
    $region45: #{tpu_custom_call.1} parent=1 // pred_fallthru
      _
    // Predicated region
    $region46: #{tpu_custom_call.1} parent=1 // pred_check
      _
    $region47: #{tpu_custom_call.1} parent=1 // pred_check_branch
      %79 = sbr.rel (0) target = $region49
    $region48: #{tpu_custom_call.1} parent=1 // pred_region
      %80 = dma.done [#allocation6], 16
    $region49: #{tpu_custom_call.1} parent=1 // pred_fallthru
      _
    // Predicated region
    $region50: #{tpu_custom_call.1} parent=1 // pred_check
      _
    $region51: #{tpu_custom_call.1} parent=1 // pred_check_branch
      %82 = sbr.rel (0) target = $region53
    $region52: #{tpu_custom_call.1} parent=1 // pred_region
      %83 = dma.done [#allocation9], 16
    $region53: #{tpu_custom_call.1} parent=1 // pred_fallthru
      _
    %v84 = vld [vmem:[%s0] sm:$0xff]
    %v85 = vld [vmem:[%s2] sm:$0xff]
    %v86 = vld [vmem:[%s2 + $0x8] sm:$0xff]
    %v87 = vld [vmem:[%s2 + $0x10] sm:$0xf]
    %v88 = vld [vmem:[#allocation2] sm:$0xff]
    %v89 = vld [vmem:[#allocation5] sm:$0xff]
    %v90 = vld [vmem:[#allocation5 + $0x8] sm:$0xff]
    %v91 = vld [vmem:[#allocation5 + $0x10] sm:$0xf]
    %vm92 = vcmask 162816
    %v94 = vsel %vm92, %v88, 0
    %vm96 = vcmask 1043456
    %v98 = vsel %vm96, %v91, 0
    %100 = vmatprep.subr.mxu0 0.0
    %101 = vmatpush1.msra.mxu0 %v89
    %102 = vmatprep.subr.mxu0 0.0
    %103 = vmatpush1.msra.mxu0 %v90
    %104 = vmatprep.subr.mxu0 0.0
    %105 = vmatpush1.msra.mxu0 %v98
    %106 = vmatprep.subr.mxu0 0.0
    %107 = vmatpush1.msra.mxu0 0.0
    %108 = vmatprep.subr.mxu0 0.0
    %109 = vmatpush1.msra.mxu0 0.0
    %110 = vmatprep.subr.mxu0 0.0
    %111 = vmatpush1.msra.mxu0 0.0
    %112 = vmatprep.subr.mxu0 0.0
    %113 = vmatpush1.msra.mxu0 0.0
    %114 = vmatprep.subr.mxu0 0.0
    %115 = vmatpush1.msra.mxu0 0.0
    %116 = vmatprep.subr.mxu0 0.0
    %117 = vmatpush1.msra.mxu0 0.0
    %118 = vmatprep.subr.mxu0 0.0
    %119 = vmatpush1.msra.mxu0 0.0
    %120 = vmatprep.subr.mxu0 0.0
    %121 = vmatpush1.msra.mxu0 0.0
    %122 = vmatprep.subr.mxu0 0.0
    %123 = vmatpush1.msra.mxu0 0.0
    %124 = vmatprep.subr.mxu0 0.0
    %125 = vmatpush1.msra.mxu0 0.0
    %126 = vmatprep.subr.mxu0 0.0
    %127 = vmatpush1.msra.mxu0 0.0
    %128 = vmatprep.subr.mxu0 0.0
    %129 = vmatpush1.msra.mxu0 0.0
    %130 = vmatprep.subr.mxu0 0.0
    %131 = vmatpush1.msra.mxu0 0.0
    %132 = vmatprep.subr.mxu0 0.0
    %133 = vmatpush1.msra.mxu0 0.0
    %134 = vmatprep.subr.mxu0 0.0
    %135 = vmatpush1.msra.mxu0 0.0
    %136 = vmatprep.subr.mxu0 0.0
    %137 = vmatpush1.msra.mxu0 0.0
    %138 = vmatprep.subr.mxu0 0.0
    %139 = vmatpush1.msra.mxu0 0.0
    %140 = vmatprep.subr.mxu0 0.0
    %141 = vmatpush1.msra.mxu0 0.0
    %142 = vmatprep.subr.mxu0 0.0
    %143 = vmatpush1.msra.mxu0 0.0
    %144 = vmatprep.subr.mxu0 0.0
    %145 = vmatpush1.msra.mxu0 0.0
    %146 = vmatprep.subr.mxu0 0.0
    %147 = vmatpush1.msra.mxu0 0.0
    %148 = vmatprep.subr.mxu0 0.0
    %149 = vmatpush1.msra.mxu0 0.0
    %150 = vmatprep.subr.mxu0 0.0
    %151 = vmatpush1.msra.mxu0 0.0
    %152 = vmatprep.subr.mxu0 0.0
    %153 = vmatpush1.msra.mxu0 0.0
    %154 = vmatprep.subr.mxu0 0.0
    %155 = vmatpush1.msra.mxu0 0.0
    %156 = vmatprep.subr.mxu0 0.0
    %157 = vmatpush1.msra.mxu0 0.0
    %158 = vmatprep.subr.mxu0 0.0
    %159 = vmatpush1.msra.mxu0 0.0
    %160 = vmatprep.subr.mxu0 0.0
    %161 = vmatpush1.msra.mxu0 0.0
    %162 = vmatprep.subr.mxu0 0.0
    %163 = vmatpush1.msra.mxu0 0.0
    %164 = vmatprep.mubr.f32.mxu0 0.0
    %165 = vmatmul.mubr.f32.gmra.mrb[0].mxu0 %v94
    %v166 = vpop.f32.mrb[0].mxu0
    %v167 = vadd.f32 0.0, %v166
    %v168 = vpop.f32.mrb[0].mxu0
    %169 = vdwg.mxu0
    %v171 = vsel %vm92, %v84, 0
    %v174 = vsel %vm96, %v87, 0
    %176 = vmatprep.subr.mxu0 0.0
    %177 = vmatpush1.msra.mxu0 %v85
    %178 = vmatprep.subr.mxu0 0.0
    %179 = vmatpush1.msra.mxu0 %v86
    %180 = vmatprep.subr.mxu0 0.0
    %181 = vmatpush1.msra.mxu0 %v174
    %182 = vmatprep.subr.mxu0 0.0
    %183 = vmatpush1.msra.mxu0 0.0
    %184 = vmatprep.subr.mxu0 0.0
    %185 = vmatpush1.msra.mxu0 0.0
    %186 = vmatprep.subr.mxu0 0.0
    %187 = vmatpush1.msra.mxu0 0.0
    %188 = vmatprep.subr.mxu0 0.0
    %189 = vmatpush1.msra.mxu0 0.0
    %190 = vmatprep.subr.mxu0 0.0
    %191 = vmatpush1.msra.mxu0 0.0
    %192 = vmatprep.subr.mxu0 0.0
    %193 = vmatpush1.msra.mxu0 0.0
    %194 = vmatprep.subr.mxu0 0.0
    %195 = vmatpush1.msra.mxu0 0.0
    %196 = vmatprep.subr.mxu0 0.0
    %197 = vmatpush1.msra.mxu0 0.0
    %198 = vmatprep.subr.mxu0 0.0
    %199 = vmatpush1.msra.mxu0 0.0
    %200 = vmatprep.subr.mxu0 0.0
    %201 = vmatpush1.msra.mxu0 0.0
    %202 = vmatprep.subr.mxu0 0.0
    %203 = vmatpush1.msra.mxu0 0.0
    %204 = vmatprep.subr.mxu0 0.0
    %205 = vmatpush1.msra.mxu0 0.0
    %206 = vmatprep.subr.mxu0 0.0
    %207 = vmatpush1.msra.mxu0 0.0
    %208 = vmatprep.subr.mxu0 0.0
    %209 = vmatpush1.msra.mxu0 0.0
    %210 = vmatprep.subr.mxu0 0.0
    %211 = vmatpush1.msra.mxu0 0.0
    %212 = vmatprep.subr.mxu0 0.0
    %213 = vmatpush1.msra.mxu0 0.0
    %214 = vmatprep.subr.mxu0 0.0
    %215 = vmatpush1.msra.mxu0 0.0
    %216 = vmatprep.subr.mxu0 0.0
    %217 = vmatpush1.msra.mxu0 0.0
    %218 = vmatprep.subr.mxu0 0.0
    %219 = vmatpush1.msra.mxu0 0.0
    %220 = vmatprep.subr.mxu0 0.0
    %221 = vmatpush1.msra.mxu0 0.0
    %222 = vmatprep.subr.mxu0 0.0
    %223 = vmatpush1.msra.mxu0 0.0
    %224 = vmatprep.subr.mxu0 0.0
    %225 = vmatpush1.msra.mxu0 0.0
    %226 = vmatprep.subr.mxu0 0.0
    %227 = vmatpush1.msra.mxu0 0.0
    %228 = vmatprep.subr.mxu0 0.0
    %229 = vmatpush1.msra.mxu0 0.0
    %230 = vmatprep.subr.mxu0 0.0
    %231 = vmatpush1.msra.mxu0 0.0
    %232 = vmatprep.subr.mxu0 0.0
    %233 = vmatpush1.msra.mxu0 0.0
    %234 = vmatprep.subr.mxu0 0.0
    %235 = vmatpush1.msra.mxu0 0.0
    %236 = vmatprep.subr.mxu0 0.0
    %237 = vmatpush1.msra.mxu0 0.0
    %238 = vmatprep.subr.mxu0 0.0
    %239 = vmatpush1.msra.mxu0 0.0
    %240 = vmatprep.mubr.f32.mxu0 0.0
    %241 = vmatmul.mubr.f32.gmra.mrb[0].mxu0 %v171
    %v242 = vpop.f32.mrb[0].mxu0
    %v243 = vadd.f32 %v167, %v242
    %v244 = vpop.f32.mrb[0].mxu0
    %245 = vdwg.mxu0
    %v246 = vld [vmem:[#allocation7] sm:$0x1]
    %v248 = vlaneseq
    %v249 = vshrl.u32 %v248, 7
    %v250 = vsub.s32 0, %v249
    %v251 = vrot.slane %v246, %v250
    %v253 = vadd.f32 %v243, %v251
    %v254 = vmax.f32 %v253, 0.0
    %v255 = vld [vmem:[%s5] sm:$0xff]
    %v256 = vld [vmem:[%s5 + $0x8] sm:$0xff]
    %v257 = vld [vmem:[%s5 + $0x10] sm:$0xff]
    %v258 = vld [vmem:[%s5 + $0x18] sm:$0xff]
    %v259 = vld [vmem:[%s5 + $0x20] sm:$0xff]
    %v260 = vld [vmem:[%s5 + $0x28] sm:$0xff]
    %v261 = vld [vmem:[%s5 + $0x30] sm:$0xff]
    %v262 = vld [vmem:[%s5 + $0x38] sm:$0xff]
    %v263 = vld [vmem:[%s5 + $0x40] sm:$0xff]
    %v264 = vld [vmem:[%s5 + $0x48] sm:$0xff]
    %v265 = vld [vmem:[%s5 + $0x50] sm:$0xff]
    %v266 = vld [vmem:[%s5 + $0x58] sm:$0xff]
    %v267 = vld [vmem:[%s5 + $0x60] sm:$0xff]
    %v268 = vld [vmem:[%s5 + $0x68] sm:$0xff]
    %v269 = vld [vmem:[%s5 + $0x70] sm:$0xff]
    %v270 = vld [vmem:[%s5 + $0x78] sm:$0xff]
    %v271 = vld [vmem:[#allocation8] sm:$0x1]
    %v273 = vlaneseq
    %v274 = vshrl.u32 %v273, 7
    %v275 = vsub.s32 0, %v274
    %v276 = vrot.slane %v271, %v275
    %278 = vmatprep.subr.mxu0 0.0
    %279 = vmatpush1.msra.mxu0 %v255
    %280 = vmatprep.subr.mxu0 0.0
    %281 = vmatpush1.msra.mxu0 %v256
    %282 = vmatprep.subr.mxu0 0.0
    %283 = vmatpush1.msra.mxu0 %v257
    %284 = vmatprep.subr.mxu0 0.0
    %285 = vmatpush1.msra.mxu0 %v258
    %286 = vmatprep.subr.mxu0 0.0
    %287 = vmatpush1.msra.mxu0 %v259
    %288 = vmatprep.subr.mxu0 0.0
    %289 = vmatpush1.msra.mxu0 %v260
    %290 = vmatprep.subr.mxu0 0.0
    %291 = vmatpush1.msra.mxu0 %v261
    %292 = vmatprep.subr.mxu0 0.0
    %293 = vmatpush1.msra.mxu0 %v262
    %294 = vmatprep.subr.mxu0 0.0
    %295 = vmatpush1.msra.mxu0 %v263
    %296 = vmatprep.subr.mxu0 0.0
    %297 = vmatpush1.msra.mxu0 %v264
    %298 = vmatprep.subr.mxu0 0.0
    %299 = vmatpush1.msra.mxu0 %v265
    %300 = vmatprep.subr.mxu0 0.0
    %301 = vmatpush1.msra.mxu0 %v266
    %302 = vmatprep.subr.mxu0 0.0
    %303 = vmatpush1.msra.mxu0 %v267
    %304 = vmatprep.subr.mxu0 0.0
    %305 = vmatpush1.msra.mxu0 %v268
    %306 = vmatprep.subr.mxu0 0.0
    %307 = vmatpush1.msra.mxu0 %v269
    %308 = vmatprep.subr.mxu0 0.0
    %309 = vmatpush1.msra.mxu0 %v270
    %310 = vmatprep.subr.mxu0 0.0
    %311 = vmatpush1.msra.mxu0 0.0
    %312 = vmatprep.subr.mxu0 0.0
    %313 = vmatpush1.msra.mxu0 0.0
    %314 = vmatprep.subr.mxu0 0.0
    %315 = vmatpush1.msra.mxu0 0.0
    %316 = vmatprep.subr.mxu0 0.0
    %317 = vmatpush1.msra.mxu0 0.0
    %318 = vmatprep.subr.mxu0 0.0
    %319 = vmatpush1.msra.mxu0 0.0
    %320 = vmatprep.subr.mxu0 0.0
    %321 = vmatpush1.msra.mxu0 0.0
    %322 = vmatprep.subr.mxu0 0.0
    %323 = vmatpush1.msra.mxu0 0.0
    %324 = vmatprep.subr.mxu0 0.0
    %325 = vmatpush1.msra.mxu0 0.0
    %326 = vmatprep.subr.mxu0 0.0
    %327 = vmatpush1.msra.mxu0 0.0
    %328 = vmatprep.subr.mxu0 0.0
    %329 = vmatpush1.msra.mxu0 0.0
    %330 = vmatprep.subr.mxu0 0.0
    %331 = vmatpush1.msra.mxu0 0.0
    %332 = vmatprep.subr.mxu0 0.0
    %333 = vmatpush1.msra.mxu0 0.0
    %334 = vmatprep.subr.mxu0 0.0
    %335 = vmatpush1.msra.mxu0 0.0
    %336 = vmatprep.subr.mxu0 0.0
    %337 = vmatpush1.msra.mxu0 0.0
    %338 = vmatprep.subr.mxu0 0.0
    %339 = vmatpush1.msra.mxu0 0.0
    %340 = vmatprep.subr.mxu0 0.0
    %341 = vmatpush1.msra.mxu0 0.0
    %342 = vmatprep.mubr.f32.mxu0 0.0
    %343 = vmatmul.mubr.f32.gmra.mrb[0].mxu0 %v254
    %v344 = vpop.f32.mrb[0].mxu0
    %v345 = vadd.f32 %v276, %v344
    %v346 = vpop.f32.mrb[0].mxu0
    %347 = vdwg.mxu0
    %v348 = vmax.f32 %v345, 0.0
    %v349 = vld [vmem:[%s7] sm:$0xff]
    %v350 = vld [vmem:[%s7 + $0x8] sm:$0xff]
    %v351 = vld [vmem:[%s7 + $0x10] sm:$0xff]
    %v352 = vld [vmem:[%s7 + $0x18] sm:$0xff]
    %v353 = vld [vmem:[%s7 + $0x20] sm:$0xff]
    %v354 = vld [vmem:[%s7 + $0x28] sm:$0xff]
    %v355 = vld [vmem:[%s7 + $0x30] sm:$0xff]
    %v356 = vld [vmem:[%s7 + $0x38] sm:$0xff]
    %v357 = vld [vmem:[%s7 + $0x40] sm:$0xff]
    %v358 = vld [vmem:[%s7 + $0x48] sm:$0xff]
    %v359 = vld [vmem:[%s7 + $0x50] sm:$0xff]
    %v360 = vld [vmem:[%s7 + $0x58] sm:$0xff]
    %v361 = vld [vmem:[%s7 + $0x60] sm:$0xff]
    %v362 = vld [vmem:[%s7 + $0x68] sm:$0xff]
    %v363 = vld [vmem:[%s7 + $0x70] sm:$0xff]
    %v364 = vld [vmem:[%s7 + $0x78] sm:$0xff]
    %v365 = vld [vmem:[%s8] sm:$0x1]
    %v367 = vlaneseq
    %v368 = vshrl.u32 %v367, 7
    %v369 = vsub.s32 0, %v368
    %v370 = vrot.slane %v365, %v369
    %372 = vmatprep.subr.mxu0 0.0
    %373 = vmatpush1.msra.mxu0 %v349
    %374 = vmatprep.subr.mxu0 0.0
    %375 = vmatpush1.msra.mxu0 %v350
    %376 = vmatprep.subr.mxu0 0.0
    %377 = vmatpush1.msra.mxu0 %v351
    %378 = vmatprep.subr.mxu0 0.0
    %379 = vmatpush1.msra.mxu0 %v352
    %380 = vmatprep.subr.mxu0 0.0
    %381 = vmatpush1.msra.mxu0 %v353
    %382 = vmatprep.subr.mxu0 0.0
    %383 = vmatpush1.msra.mxu0 %v354
    %384 = vmatprep.subr.mxu0 0.0
    %385 = vmatpush1.msra.mxu0 %v355
    %386 = vmatprep.subr.mxu0 0.0
    %387 = vmatpush1.msra.mxu0 %v356
    %388 = vmatprep.subr.mxu0 0.0
    %389 = vmatpush1.msra.mxu0 %v357
    %390 = vmatprep.subr.mxu0 0.0
    %391 = vmatpush1.msra.mxu0 %v358
    %392 = vmatprep.subr.mxu0 0.0
    %393 = vmatpush1.msra.mxu0 %v359
    %394 = vmatprep.subr.mxu0 0.0
    %395 = vmatpush1.msra.mxu0 %v360
    %396 = vmatprep.subr.mxu0 0.0
    %397 = vmatpush1.msra.mxu0 %v361
    %398 = vmatprep.subr.mxu0 0.0
    %399 = vmatpush1.msra.mxu0 %v362
    %400 = vmatprep.subr.mxu0 0.0
    %401 = vmatpush1.msra.mxu0 %v363
    %402 = vmatprep.subr.mxu0 0.0
    %403 = vmatpush1.msra.mxu0 %v364
    %404 = vmatprep.subr.mxu0 0.0
    %405 = vmatpush1.msra.mxu0 0.0
    %406 = vmatprep.subr.mxu0 0.0
    %407 = vmatpush1.msra.mxu0 0.0
    %408 = vmatprep.subr.mxu0 0.0
    %409 = vmatpush1.msra.mxu0 0.0
    %410 = vmatprep.subr.mxu0 0.0
    %411 = vmatpush1.msra.mxu0 0.0
    %412 = vmatprep.subr.mxu0 0.0
    %413 = vmatpush1.msra.mxu0 0.0
    %414 = vmatprep.subr.mxu0 0.0
    %415 = vmatpush1.msra.mxu0 0.0
    %416 = vmatprep.subr.mxu0 0.0
    %417 = vmatpush1.msra.mxu0 0.0
    %418 = vmatprep.subr.mxu0 0.0
    %419 = vmatpush1.msra.mxu0 0.0
    %420 = vmatprep.subr.mxu0 0.0
    %421 = vmatpush1.msra.mxu0 0.0
    %422 = vmatprep.subr.mxu0 0.0
    %423 = vmatpush1.msra.mxu0 0.0
    %424 = vmatprep.subr.mxu0 0.0
    %425 = vmatpush1.msra.mxu0 0.0
    %426 = vmatprep.subr.mxu0 0.0
    %427 = vmatpush1.msra.mxu0 0.0
    %428 = vmatprep.subr.mxu0 0.0
    %429 = vmatpush1.msra.mxu0 0.0
    %430 = vmatprep.subr.mxu0 0.0
    %431 = vmatpush1.msra.mxu0 0.0
    %432 = vmatprep.subr.mxu0 0.0
    %433 = vmatpush1.msra.mxu0 0.0
    %434 = vmatprep.subr.mxu0 0.0
    %435 = vmatpush1.msra.mxu0 0.0
    %436 = vmatprep.mubr.f32.mxu0 0.0
    %437 = vmatmul.mubr.f32.gmra.mrb[0].mxu0 %v348
    %v438 = vpop.f32.mrb[0].mxu0
    %v439 = vadd.f32 %v370, %v438
    %v440 = vpop.f32.mrb[0].mxu0
    %441 = vdwg.mxu0
    %vm442 = vcmask 48128
    %443 = vst.msk [vmem:[#allocation10] sm:$0xff] %vm442, %v439
    // Predicated region
    $region54: #{tpu_custom_call.1} parent=1 // pred_check
      _
    $region55: #{tpu_custom_call.1} parent=1 // pred_check_branch
      %445 = sbr.rel (0) target = $region57
    $region56: #{tpu_custom_call.1} parent=1 // pred_region
      %s447 = ssub.s32 128, 32
      %448 = vsyncadd [#allocation4], %s447
      %s449 = sshll.u32 [#allocation10], 4
      %s450 = int_to_ptr.vmem [resolvable:$true] %s449
      %455 = dma.vmem_to_hbm [thread:$0]  %s450, 32, %s9, [#allocation4], 32, 32, 2
    $region57: #{tpu_custom_call.1} parent=1 // pred_fallthru
      _
    // Predicated region
    $region58: #{tpu_custom_call.1} parent=1 // pred_check
      _
    $region59: #{tpu_custom_call.1} parent=1 // pred_check_branch
      %457 = sbr.rel (0) target = $region61
    $region60: #{tpu_custom_call.1} parent=1 // pred_region
      %458 = dma.done [#allocation4], 128
    $region61: #{tpu_custom_call.1} parent=1 // pred_fallthru
      _
    %459 = vsyncpa [#allocation3], 1
    %460 = vsyncpa [#allocation6], 1
    %461 = vsyncpa [#allocation9], 1
    %462 = vsyncpa [#allocation4], 1

</llo_original>
